<compile_context>
chip_gen: v7x
topology: tpu7x:2x2x1
jax: 0.10.0
libtpu: 0.0.40
codegen_flags: <defaults>
</compile_context>

<pallas_src>
import functools
import math

import jax
import jax.numpy as jnp
from jax import lax
from jax.experimental import pallas as pl
from jax.experimental.pallas import tpu as pltpu


# ---------------------------------------------------------------------------
# Fused kernel: depthwise KxK taps (VPU, f32 accumulate) + pointwise 1x1 (MXU).
# ---------------------------------------------------------------------------
def _fused_dwsep_kernel(x_ref, wdw_ref, wpw_ref, o_ref, *, K, tileH, W1):
    # x_ref:   (1, 1, tileH+K-1, W_pad, C_in)   input slab (with K-1 row halo)
    # wdw_ref: (K*K, C_in)                      depthwise taps, row kh*K + kw
    # wpw_ref: (C_in, C_out)                    pointwise weights (mm dtype)
    # o_ref:   (1, tileH, W1, C_out)
    C_in = x_ref.shape[-1]
    C_out = o_ref.shape[-1]

    w_dw = wdw_ref[...].astype(jnp.float32)                    # (K*K, C_in)
    acc = jnp.zeros((tileH, W1, C_in), jnp.float32)
    for kh in range(K):
        for kw in range(K):
            win = x_ref[0, 0, kh:kh + tileH, kw:kw + W1, :].astype(jnp.float32)
            tap = w_dw[kh * K + kw:kh * K + kw + 1, :]          # (1, C_in) broadcast
            acc = acc + win * tap

    # Pointwise 1x1 == (tileH*W1, C_in) @ (C_in, C_out) on the MXU, fused in-kernel.
    w_pw = wpw_ref[...]
    rows = acc.reshape(tileH * W1, C_in).astype(w_pw.dtype)
    out = jnp.dot(rows, w_pw, preferred_element_type=jnp.float32)
    o_ref[0] = out.reshape(tileH, W1, C_out).astype(o_ref.dtype)


def _pick_tile_h(H1, B, W_pad, W1, C_in, C_out, itemsize,
                 budget_bytes=2 << 20, target_steps=16):
    """Rows of output per grid step: ~budget_bytes of live VMEM per step and
    enough (B * nH >= target_steps) steps for pipelining / both v7x TCs."""
    bytes_per_row = (4 * (W_pad * C_in + W1 * C_in + W1 * C_out)      # f32 temporaries
                     + itemsize * (W_pad * C_in + W1 * C_out))        # in/out blocks
    t_budget = max(8, budget_bytes // max(bytes_per_row, 1))
    want_nh = max(1, -(-target_steps // max(B, 1)))
    t_steps = max(8, -(-H1 // want_nh))
    tile = int(min(H1, t_budget, t_steps))
    if tile < H1:
        tile = max(8, (tile // 8) * 8)
    return int(min(tile, H1))


@functools.partial(jax.jit, static_argnames=("stride", "padding"))
def depthwise_separable_conv(x, w_dw, w_pw, *, stride=1, padding=1):
    """x: (B, C_in, H, W) NCHW.  w_dw: (C_in, 1, K, K).  w_pw: (C_out, C_in, 1, 1)."""
    B, C_in, H, W = x.shape
    K = w_dw.shape[-1]
    C_out = w_pw.shape[0]
    s, p = int(stride), int(padding)
    itemsize = jnp.dtype(x.dtype).itemsize

    # Layout glue (plain JAX, one pass): NHWC so channels sit in the lane dim.
    x_nhwc = jnp.transpose(x, (0, 2, 3, 1))
    H_pad, W_pad = H + 2 * p, W + 2 * p
    H1, W1 = H_pad - K + 1, W_pad - K + 1            # stride-1 output size

    # ---- H halo tiling ------------------------------------------------------
    tileH = _pick_tile_h(H1, B, W_pad, W1, C_in, C_out, itemsize)
    nH = pl.cdiv(H1, tileH)
    slabH = tileH + K - 1
    H_need = nH * tileH + K - 1                      # padded rows the slabs cover
    extra = H_need - H_pad                           # bottom zero rows (outputs sliced off)

    x_pad = jnp.pad(x_nhwc, ((0, 0), (p, p + extra), (p, p), (0, 0)))
    row_idx = jnp.arange(nH)[:, None] * tileH + jnp.arange(slabH)[None, :]
    x_slabs = x_pad[:, row_idx]                      # (B, nH, slabH, W_pad, C_in)

    # Params: f32 depthwise taps; MXU operands in bf16 only if the input is bf16.
    mm_dtype = jnp.bfloat16 if x.dtype == jnp.bfloat16 else jnp.float32
    w_dw2 = jnp.transpose(w_dw.reshape(C_in, K * K), (1, 0)).astype(jnp.float32)   # (K*K, C_in)
    w_pw2 = jnp.transpose(w_pw.reshape(C_out, C_in), (1, 0)).astype(mm_dtype)      # (C_in, C_out)

    # ---- VMEM budget + cost estimate (derived from the real block sizes) ----
    in_block = slabH * W_pad * C_in * itemsize
    out_block = tileH * W1 * C_out * itemsize
    f32_tmp = 4 * tileH * W1 * (2 * C_in + C_out)
    w_bytes = K * K * C_in * 4 + C_in * C_out * jnp.dtype(mm_dtype).itemsize
    need = 2 * (in_block + out_block + w_bytes) + f32_tmp
    vmem_limit = max(16 << 20, int(1.25 * need) + (2 << 20))

    flops = 2 * B * nH * tileH * W1 * C_in * (K * K + C_out)
    bytes_accessed = (x_slabs.size * itemsize
                      + B * nH * tileH * W1 * C_out * itemsize
                      + w_dw2.size * 4
                      + w_pw2.size * jnp.dtype(mm_dtype).itemsize)

    out = pl.pallas_call(
        functools.partial(_fused_dwsep_kernel, K=K, tileH=tileH, W1=W1),
        out_shape=jax.ShapeDtypeStruct((B, nH * tileH, W1, C_out), x.dtype),
        grid=(B, nH),
        in_specs=[
            pl.BlockSpec((1, 1, slabH, W_pad, C_in), lambda b, h: (b, h, 0, 0, 0)),
            pl.BlockSpec((K * K, C_in), lambda b, h: (0, 0)),
            pl.BlockSpec((C_in, C_out), lambda b, h: (0, 0)),
        ],
        out_specs=pl.BlockSpec((1, tileH, W1, C_out), lambda b, h: (b, h, 0, 0)),
        compiler_params=pltpu.CompilerParams(
            dimension_semantics=("parallel", "parallel"),
            vmem_limit_bytes=vmem_limit),
        cost_estimate=pl.CostEstimate(flops=flops, transcendentals=0,
                                      bytes_accessed=bytes_accessed),
    )(x_slabs, w_dw2, w_pw2)

    out = out[:, :H1]                                # drop bottom tile padding rows
    if s > 1:
        # Pointwise 1x1 commutes with subsampling, so this is exact.
        # TODO(synk): compute only strided outputs inside the kernel instead.
        out = out[:, ::s, ::s, :]
    return jnp.transpose(out, (0, 3, 1, 2))          # back to NCHW (torch layout)


class DepthwiseSeparableConv:
    """Pallas TPU port of the PyTorch DepthwiseSeparableConv forward pass."""

    def __init__(self, in_ch, out_ch, stride=1, kernel_size=3, padding=1, bias=False,
                 *, key=None):
        if bias:
            # TODO(synk): bias=True path not implemented (module default is bias=False).
            raise NotImplementedError("bias=True not supported")
        self.in_ch, self.out_ch = in_ch, out_ch
        self.stride, self.kernel_size, self.padding = int(stride), int(kernel_size), int(padding)
        if key is None:
            key = jax.random.PRNGKey(0)
        k1, k2 = jax.random.split(key)
        # torch-shaped float32 parameters (deterministic init).
        self.w_depthwise = (
            jax.random.uniform(k1, (in_ch, 1, kernel_size, kernel_size), jnp.float32,
                               minval=-1.0, maxval=1.0) / math.sqrt(kernel_size * kernel_size))
        self.w_pointwise = (
            jax.random.uniform(k2, (out_ch, in_ch, 1, 1), jnp.float32,
                               minval=-1.0, maxval=1.0) / math.sqrt(in_ch))

    def __call__(self, x):
        return depthwise_separable_conv(
            x, self.w_depthwise, self.w_pointwise,
            stride=self.stride, padding=self.padding)


# ---------------------------------------------------------------------------
# Pure-JAX reference (matches torch semantics) for validation.
# ---------------------------------------------------------------------------
def _ref_depthwise_separable(x, w_dw, w_pw, stride, padding):
    dn = ("NCHW", "OIHW", "NCHW")
    dw = lax.conv_general_dilated(
        x, w_dw, window_strides=(stride, stride),
        padding=[(padding, padding), (padding, padding)],
        dimension_numbers=dn, feature_group_count=x.shape[1],
        precision=lax.Precision.HIGHEST)
    return lax.conv_general_dilated(
        dw, w_pw, window_strides=(1, 1), padding=[(0, 0), (0, 0)],
        dimension_numbers=dn, precision=lax.Precision.HIGHEST)


if __name__ == "__main__":
    key = jax.random.PRNGKey(0)
    k_x, k_p, k_x2 = jax.random.split(key, 3)

    # Case 1: module defaults (stride=1), small shapes.
    B, C_in, H, W = 2, 4, 16, 16
    C_out = 8
    x = jax.random.normal(k_x, (B, C_in, H, W), dtype=jnp.float32)
    conv = DepthwiseSeparableConv(C_in, C_out, stride=1, kernel_size=3, padding=1,
                                  bias=False, key=k_p)
    out = jax.block_until_ready(conv(x))
    ref = _ref_depthwise_separable(x, conv.w_depthwise, conv.w_pointwise, 1, 1)
    assert out.shape == ref.shape, (out.shape, ref.shape)
    err = float(jnp.max(jnp.abs(out - ref)))
    assert jnp.allclose(out, ref, atol=1e-4, rtol=1e-4), f"stride=1 max abs err {err}"

    # Case 2: stride=2 with a ragged H tile (exercises halo padding + subsample path).
    H2 = W2 = 20
    x2 = jax.random.normal(k_x2, (B, C_in, H2, W2), dtype=jnp.float32)
    conv2 = DepthwiseSeparableConv(C_in, C_out, stride=2, kernel_size=3, padding=1,
                                   bias=False, key=k_p)
    out2 = jax.block_until_ready(conv2(x2))
    ref2 = _ref_depthwise_separable(x2, conv2.w_depthwise, conv2.w_pointwise, 2, 1)
    assert out2.shape == ref2.shape, (out2.shape, ref2.shape)
    err2 = float(jnp.max(jnp.abs(out2 - ref2)))
    assert jnp.allclose(out2, ref2, atol=1e-4, rtol=1e-4), f"stride=2 max abs err {err2}"

    print("KERNEL_OK")
</pallas_src>

<mosaic_0001>
module attributes {stable_mosaic.version = 11 : i64} {
  func.func @_fused_dwsep_kernel(%arg0: i32, %arg1: i32, %arg2: memref<1x1x10x18x4xf32, #tpu.memory_space<vmem>>, %arg3: memref<9x4xf32, #tpu.memory_space<vmem>>, %arg4: memref<4x8xf32, #tpu.memory_space<vmem>>, %arg5: memref<1x8x16x8xf32, #tpu.memory_space<vmem>>) attributes {dimension_semantics = [#tpu.dimension_semantics<parallel>, #tpu.dimension_semantics<parallel>], iteration_bounds = array<i64: 2, 2>, scalar_prefetch = 0 : i64, scratch_operands = 0 : i64, tpu.core_type = #tpu.core_type<tc>, window_params = [{transform_indices = @transform_0, window_bounds = array<i64: 1, 1, 10, 18, 4>}, {pipeline_mode = #tpu.pipeline_mode<synchronous>, transform_indices = @transform_1, window_bounds = array<i64: 9, 4>}, {pipeline_mode = #tpu.pipeline_mode<synchronous>, transform_indices = @transform_2, window_bounds = array<i64: 4, 8>}, {transform_indices = @transform_3, window_bounds = array<i64: 1, 8, 16, 8>}]} {
    %c0 = arith.constant 0 : index
    %c0_0 = arith.constant 0 : index
    %0 = vector.load %arg3[%c0, %c0_0] : memref<9x4xf32, #tpu.memory_space<vmem>>, vector<9x4xf32>
    %cst = arith.constant 0.000000e+00 : f32
    %1 = vector.broadcast %cst : f32 to vector<8x16x4xf32>
    %c0_1 = arith.constant 0 : index
    %c0_2 = arith.constant 0 : index
    %c0_3 = arith.constant 0 : index
    %c0_4 = arith.constant 0 : index
    %c0_5 = arith.constant 0 : index
    %2 = vector.load %arg2[%c0_1, %c0_2, %c0_3, %c0_4, %c0_5] : memref<1x1x10x18x4xf32, #tpu.memory_space<vmem>>, vector<1x1x8x16x4xf32>
    %3 = vector.shape_cast %2 : vector<1x1x8x16x4xf32> to vector<8x16x4xf32>
    %4 = vector.extract_strided_slice %0 {offsets = [0, 0], sizes = [1, 4], strides = [1, 1]} : vector<9x4xf32> to vector<1x4xf32>
    %5 = vector.shape_cast %4 : vector<1x4xf32> to vector<1x1x4xf32>
    %6 = vector.broadcast %5 : vector<1x1x4xf32> to vector<8x16x4xf32>
    %7 = arith.mulf %3, %6 : vector<8x16x4xf32>
    %8 = arith.addf %1, %7 : vector<8x16x4xf32>
    %c0_6 = arith.constant 0 : index
    %c0_7 = arith.constant 0 : index
    %c0_8 = arith.constant 0 : index
    %c1 = arith.constant 1 : index
    %c0_9 = arith.constant 0 : index
    %9 = vector.load %arg2[%c0_6, %c0_7, %c0_8, %c1, %c0_9] : memref<1x1x10x18x4xf32, #tpu.memory_space<vmem>>, vector<1x1x8x16x4xf32>
    %10 = vector.shape_cast %9 : vector<1x1x8x16x4xf32> to vector<8x16x4xf32>
    %11 = vector.extract_strided_slice %0 {offsets = [1, 0], sizes = [1, 4], strides = [1, 1]} : vector<9x4xf32> to vector<1x4xf32>
    %12 = vector.shape_cast %11 : vector<1x4xf32> to vector<1x1x4xf32>
    %13 = vector.broadcast %12 : vector<1x1x4xf32> to vector<8x16x4xf32>
    %14 = arith.mulf %10, %13 : vector<8x16x4xf32>
    %15 = arith.addf %8, %14 : vector<8x16x4xf32>
    %c0_10 = arith.constant 0 : index
    %c0_11 = arith.constant 0 : index
    %c0_12 = arith.constant 0 : index
    %c2 = arith.constant 2 : index
    %c0_13 = arith.constant 0 : index
    %16 = vector.load %arg2[%c0_10, %c0_11, %c0_12, %c2, %c0_13] : memref<1x1x10x18x4xf32, #tpu.memory_space<vmem>>, vector<1x1x8x16x4xf32>
    %17 = vector.shape_cast %16 : vector<1x1x8x16x4xf32> to vector<8x16x4xf32>
    %18 = vector.extract_strided_slice %0 {offsets = [2, 0], sizes = [1, 4], strides = [1, 1]} : vector<9x4xf32> to vector<1x4xf32>
    %19 = vector.shape_cast %18 : vector<1x4xf32> to vector<1x1x4xf32>
    %20 = vector.broadcast %19 : vector<1x1x4xf32> to vector<8x16x4xf32>
    %21 = arith.mulf %17, %20 : vector<8x16x4xf32>
    %22 = arith.addf %15, %21 : vector<8x16x4xf32>
    %c0_14 = arith.constant 0 : index
    %c0_15 = arith.constant 0 : index
    %c1_16 = arith.constant 1 : index
    %c0_17 = arith.constant 0 : index
    %c0_18 = arith.constant 0 : index
    %23 = vector.load %arg2[%c0_14, %c0_15, %c1_16, %c0_17, %c0_18] : memref<1x1x10x18x4xf32, #tpu.memory_space<vmem>>, vector<1x1x8x16x4xf32>
    %24 = vector.shape_cast %23 : vector<1x1x8x16x4xf32> to vector<8x16x4xf32>
    %25 = vector.extract_strided_slice %0 {offsets = [3, 0], sizes = [1, 4], strides = [1, 1]} : vector<9x4xf32> to vector<1x4xf32>
    %26 = vector.shape_cast %25 : vector<1x4xf32> to vector<1x1x4xf32>
    %27 = vector.broadcast %26 : vector<1x1x4xf32> to vector<8x16x4xf32>
    %28 = arith.mulf %24, %27 : vector<8x16x4xf32>
    %29 = arith.addf %22, %28 : vector<8x16x4xf32>
    %c0_19 = arith.constant 0 : index
    %c0_20 = arith.constant 0 : index
    %c1_21 = arith.constant 1 : index
    %c1_22 = arith.constant 1 : index
    %c0_23 = arith.constant 0 : index
    %30 = vector.load %arg2[%c0_19, %c0_20, %c1_21, %c1_22, %c0_23] : memref<1x1x10x18x4xf32, #tpu.memory_space<vmem>>, vector<1x1x8x16x4xf32>
    %31 = vector.shape_cast %30 : vector<1x1x8x16x4xf32> to vector<8x16x4xf32>
    %32 = vector.extract_strided_slice %0 {offsets = [4, 0], sizes = [1, 4], strides = [1, 1]} : vector<9x4xf32> to vector<1x4xf32>
    %33 = vector.shape_cast %32 : vector<1x4xf32> to vector<1x1x4xf32>
    %34 = vector.broadcast %33 : vector<1x1x4xf32> to vector<8x16x4xf32>
    %35 = arith.mulf %31, %34 : vector<8x16x4xf32>
    %36 = arith.addf %29, %35 : vector<8x16x4xf32>
    %c0_24 = arith.constant 0 : index
    %c0_25 = arith.constant 0 : index
    %c1_26 = arith.constant 1 : index
    %c2_27 = arith.constant 2 : index
    %c0_28 = arith.constant 0 : index
    %37 = vector.load %arg2[%c0_24, %c0_25, %c1_26, %c2_27, %c0_28] : memref<1x1x10x18x4xf32, #tpu.memory_space<vmem>>, vector<1x1x8x16x4xf32>
    %38 = vector.shape_cast %37 : vector<1x1x8x16x4xf32> to vector<8x16x4xf32>
    %39 = vector.extract_strided_slice %0 {offsets = [5, 0], sizes = [1, 4], strides = [1, 1]} : vector<9x4xf32> to vector<1x4xf32>
    %40 = vector.shape_cast %39 : vector<1x4xf32> to vector<1x1x4xf32>
    %41 = vector.broadcast %40 : vector<1x1x4xf32> to vector<8x16x4xf32>
    %42 = arith.mulf %38, %41 : vector<8x16x4xf32>
    %43 = arith.addf %36, %42 : vector<8x16x4xf32>
    %c0_29 = arith.constant 0 : index
    %c0_30 = arith.constant 0 : index
    %c2_31 = arith.constant 2 : index
    %c0_32 = arith.constant 0 : index
    %c0_33 = arith.constant 0 : index
    %44 = vector.load %arg2[%c0_29, %c0_30, %c2_31, %c0_32, %c0_33] : memref<1x1x10x18x4xf32, #tpu.memory_space<vmem>>, vector<1x1x8x16x4xf32>
    %45 = vector.shape_cast %44 : vector<1x1x8x16x4xf32> to vector<8x16x4xf32>
    %46 = vector.extract_strided_slice %0 {offsets = [6, 0], sizes = [1, 4], strides = [1, 1]} : vector<9x4xf32> to vector<1x4xf32>
    %47 = vector.shape_cast %46 : vector<1x4xf32> to vector<1x1x4xf32>
    %48 = vector.broadcast %47 : vector<1x1x4xf32> to vector<8x16x4xf32>
    %49 = arith.mulf %45, %48 : vector<8x16x4xf32>
    %50 = arith.addf %43, %49 : vector<8x16x4xf32>
    %c0_34 = arith.constant 0 : index
    %c0_35 = arith.constant 0 : index
    %c2_36 = arith.constant 2 : index
    %c1_37 = arith.constant 1 : index
    %c0_38 = arith.constant 0 : index
    %51 = vector.load %arg2[%c0_34, %c0_35, %c2_36, %c1_37, %c0_38] : memref<1x1x10x18x4xf32, #tpu.memory_space<vmem>>, vector<1x1x8x16x4xf32>
    %52 = vector.shape_cast %51 : vector<1x1x8x16x4xf32> to vector<8x16x4xf32>
    %53 = vector.extract_strided_slice %0 {offsets = [7, 0], sizes = [1, 4], strides = [1, 1]} : vector<9x4xf32> to vector<1x4xf32>
    %54 = vector.shape_cast %53 : vector<1x4xf32> to vector<1x1x4xf32>
    %55 = vector.broadcast %54 : vector<1x1x4xf32> to vector<8x16x4xf32>
    %56 = arith.mulf %52, %55 : vector<8x16x4xf32>
    %57 = arith.addf %50, %56 : vector<8x16x4xf32>
    %c0_39 = arith.constant 0 : index
    %c0_40 = arith.constant 0 : index
    %c2_41 = arith.constant 2 : index
    %c2_42 = arith.constant 2 : index
    %c0_43 = arith.constant 0 : index
    %58 = vector.load %arg2[%c0_39, %c0_40, %c2_41, %c2_42, %c0_43] : memref<1x1x10x18x4xf32, #tpu.memory_space<vmem>>, vector<1x1x8x16x4xf32>
    %59 = vector.shape_cast %58 : vector<1x1x8x16x4xf32> to vector<8x16x4xf32>
    %60 = vector.extract_strided_slice %0 {offsets = [8, 0], sizes = [1, 4], strides = [1, 1]} : vector<9x4xf32> to vector<1x4xf32>
    %61 = vector.shape_cast %60 : vector<1x4xf32> to vector<1x1x4xf32>
    %62 = vector.broadcast %61 : vector<1x1x4xf32> to vector<8x16x4xf32>
    %63 = arith.mulf %59, %62 : vector<8x16x4xf32>
    %64 = arith.addf %57, %63 : vector<8x16x4xf32>
    %c0_44 = arith.constant 0 : index
    %c0_45 = arith.constant 0 : index
    %65 = vector.load %arg4[%c0_44, %c0_45] : memref<4x8xf32, #tpu.memory_space<vmem>>, vector<4x8xf32>
    %66 = vector.shape_cast %64 : vector<8x16x4xf32> to vector<128x4xf32>
    %cst_46 = arith.constant dense<0.000000e+00> : vector<128x8xf32>
    %67 = tpu.matmul %66, %65, %cst_46 {dimension_numbers = #tpu.dot_dimension_numbers<[1], [0], [0], [1], [0, 0, 1, 1], [], []>} : vector<128x4xf32>, vector<4x8xf32>, vector<128x8xf32> -> vector<128x8xf32>
    %68 = vector.shape_cast %67 : vector<128x8xf32> to vector<8x16x8xf32>
    %c0_47 = arith.constant 0 : index
    %c0_48 = arith.constant 0 : index
    %c0_49 = arith.constant 0 : index
    %c0_50 = arith.constant 0 : index
    %69 = vector.load %arg5[%c0_47, %c0_48, %c0_49, %c0_50] : memref<1x8x16x8xf32, #tpu.memory_space<vmem>>, vector<1x8x16x8xf32>
    %70 = vector.shape_cast %69 : vector<1x8x16x8xf32> to vector<8x16x8xf32>
    %71 = vector.shape_cast %68 : vector<8x16x8xf32> to vector<1x8x16x8xf32>
    tpu.vector_store %arg5[%c0_47, %c0_48, %c0_49, %c0_50], %71 {strides = array<i32>} : memref<1x8x16x8xf32, #tpu.memory_space<vmem>>, vector<1x8x16x8xf32>,
    return
  }
  func.func @transform_0(%arg0: i32, %arg1: i32) -> (i32, i32, i32, i32, i32) {
    %c0_i32 = arith.constant 0 : i32
    %c0_i32_0 = arith.constant 0 : i32
    %c0_i32_1 = arith.constant 0 : i32
    %c0_i32_2 = arith.constant 0 : i32
    return %arg0, %arg1, %c0_i32, %c0_i32_0, %c0_i32_1 : i32, i32, i32, i32, i32
  }
  func.func @transform_1(%arg0: i32, %arg1: i32) -> (i32, i32) {
    %c0_i32 = arith.constant 0 : i32
    %c0_i32_0 = arith.constant 0 : i32
    %c0_i32_1 = arith.constant 0 : i32
    return %c0_i32, %c0_i32_0 : i32, i32
  }
  func.func @transform_2(%arg0: i32, %arg1: i32) -> (i32, i32) {
    %c0_i32 = arith.constant 0 : i32
    %c0_i32_0 = arith.constant 0 : i32
    %c0_i32_1 = arith.constant 0 : i32
    return %c0_i32, %c0_i32_0 : i32, i32
  }
  func.func @transform_3(%arg0: i32, %arg1: i32) -> (i32, i32, i32, i32) {
    %c0_i32 = arith.constant 0 : i32
    %c0_i32_0 = arith.constant 0 : i32
    %c0_i32_1 = arith.constant 0 : i32
    return %arg0, %arg1, %c0_i32, %c0_i32_0 : i32, i32, i32, i32
  }
}

</mosaic_0001>

<llo_original>
// kernel: depthwise_separable_conv.1
$region0: #{depthwise_separable_conv.1}
  #allocation0 [shape = 'u32[]', space=smem, size = 0x4, offset = 0x4, fixed_abs, tag = 'smem constant byte address 0x4 - core index']
  #allocation1 [shape = 'u32[144,128]{1,0:T(1,128)}', space=vmem, size = 0x12000, scoped, tag = 'internal scratch']
  %s0 = inlined_call_operand.vmem [shape: f32[2,2,10,18,4], index: 0, kind: input, shape index: {}]
  %s1 = inlined_call_operand.vmem [shape: f32[9,4], index: 1, kind: input, shape index: {}]
  %s2 = inlined_call_operand.vmem [shape: f32[4,8], index: 2, kind: input, shape index: {}]
  %s3 = inlined_call_operand.vmem [shape: f32[2,16,16,8], index: 3, kind: output, shape index: {}]
  %s4 = sld [smem:[#allocation0]]
  $region45: #{depthwise_separable_conv.1} parent=0
    _
  %s6 = ssub.s32 1, %s4
  %s7 = scalar_select 0, %s6, %s4
  loop: start=0, step=1, limit=6
  $region2: #{depthwise_separable_conv.1} parent=0 // loop_pre_header
    _
  $region3: #{depthwise_separable_conv.1} parent=0 // loop_header
    %s9 = sphi 0, %s13
    %p10 = scmp.ge.s32.totalorder %s9, 6
    %s16 = sphi 0, %s28
    %s17 = sphi 0, %s24
    %s18 = sphi 0, %s16
    %s19 = sphi 0, %s17
    %s20 = sphi 0, %s18
    %s21 = sphi 0, %s19
    %s33 = sphi 0, %s35
    %s36 = sphi 0, %s33
    %s37 = sphi 0, %s36
    %s53 = sphi 0, %s37
    %s57 = sphi 0, %s57
    %s59 = sphi 0, %s57
    %s60 = sphi 0, %s59
    %s74 = sphi 0, %s60
    %s78 = sphi 0, %s78
    %s80 = sphi 0, %s78
    %s81 = sphi 0, %s80
    %s95 = sphi 0, %s81
    %s103 = sphi 0, %s105
    %s106 = sphi 0, %s103
    %s107 = sphi 0, %s106
    %s123 = sphi 0, %s107
  $region4: #{depthwise_separable_conv.1} parent=0 // loop_header_branch
    %12 = sbr.rel (%p10) target = $region8
  $region5: #{depthwise_separable_conv.1} parent=0 // loop_body
    %s14 = ssub.s32 %s9, 1
    %s15 = ssub.s32 %s9, 2
    %s22 = sadd.s32 1, %s17
    %p23 = scmp.ge.s32.totalorder %s22, 2
    %s24 = scalar_select %p23, 0, %s22
    %s25 = sadd.s32 1, %s16
    %s26 = scalar_select %p23, %s25, %s16
    %p27 = scmp.ge.s32.totalorder %s26, 2
    %s28 = scalar_select %p27, 0, %s26
    %s29 = ssub.s32 %s16, %s28
    %s30 = ssub.s32 %s17, %s24
    %s31 = sor.u32 %s29, %s30
    %p32 = scmp.eq.s32.totalorder %s31, 0
    %s34 = sadd.s32 %s33, 1
    %s35 = scalar_select %p32, %s33, %s34
    %p38 = pneg %p32
    %p39 = scmp.eq.s32.totalorder %s9, 3
    %p40 = por %p38, %p39
    %p41 = scmp.ne.s32.totalorder %s33, %s36
    %p42 = scmp.eq.s32.totalorder %s9, 0
    %p43 = por %p41, %p42
    %p44 = scmp.ne.s32.totalorder %s33, %s36
    %p45 = scmp.eq.s32.totalorder %s14, 3
    %p46 = por %p44, %p45
    %p47 = scmp.ne.s32.totalorder %s36, %s37
    %p48 = scmp.eq.s32.totalorder %s14, 0
    %p49 = por %p47, %p48
    %p50 = scmp.ne.s32.totalorder %s36, %s37
    %p51 = scmp.eq.s32.totalorder %s15, 3
    %p52 = por %p50, %p51
    %p54 = scmp.ne.s32.totalorder %s37, %s53
    %p55 = scmp.eq.s32.totalorder %s15, 0
    %p56 = por %p54, %p55
    %s58 = sadd.s32 %s57, 1
    %p61 = scmp.eq.s32.totalorder %s9, 3
    %p62 = scmp.ne.s32.totalorder %s57, %s59
    %p63 = scmp.eq.s32.totalorder %s9, 0
    %p64 = por %p62, %p63
    %p65 = scmp.ne.s32.totalorder %s57, %s59
    %p66 = scmp.eq.s32.totalorder %s14, 3
    %p67 = por %p65, %p66
    %p68 = scmp.ne.s32.totalorder %s59, %s60
    %p69 = scmp.eq.s32.totalorder %s14, 0
    %p70 = por %p68, %p69
    %p71 = scmp.ne.s32.totalorder %s59, %s60
    %p72 = scmp.eq.s32.totalorder %s15, 3
    %p73 = por %p71, %p72
    %p75 = scmp.ne.s32.totalorder %s60, %s74
    %p76 = scmp.eq.s32.totalorder %s15, 0
    %p77 = por %p75, %p76
    %s79 = sadd.s32 %s78, 1
    %p82 = scmp.eq.s32.totalorder %s9, 3
    %p83 = scmp.ne.s32.totalorder %s78, %s80
    %p84 = scmp.eq.s32.totalorder %s9, 0
    %p85 = por %p83, %p84
    %p86 = scmp.ne.s32.totalorder %s78, %s80
    %p87 = scmp.eq.s32.totalorder %s14, 3
    %p88 = por %p86, %p87
    %p89 = scmp.ne.s32.totalorder %s80, %s81
    %p90 = scmp.eq.s32.totalorder %s14, 0
    %p91 = por %p89, %p90
    %p92 = scmp.ne.s32.totalorder %s80, %s81
    %p93 = scmp.eq.s32.totalorder %s15, 3
    %p94 = por %p92, %p93
    %p96 = scmp.ne.s32.totalorder %s81, %s95
    %p97 = scmp.eq.s32.totalorder %s15, 0
    %p98 = por %p96, %p97
    %s99 = ssub.s32 %s16, %s28
    %s100 = ssub.s32 %s17, %s24
    %s101 = sor.u32 %s99, %s100
    %p102 = scmp.eq.s32.totalorder %s101, 0
    %s104 = sadd.s32 %s103, 1
    %s105 = scalar_select %p102, %s103, %s104
    %p108 = pneg %p102
    %p109 = scmp.eq.s32.totalorder %s9, 3
    %p110 = por %p108, %p109
    %p111 = scmp.ne.s32.totalorder %s103, %s106
    %p112 = scmp.eq.s32.totalorder %s9, 0
    %p113 = por %p111, %p112
    %p114 = scmp.ne.s32.totalorder %s103, %s106
    %p115 = scmp.eq.s32.totalorder %s14, 3
    %p116 = por %p114, %p115
    %p117 = scmp.ne.s32.totalorder %s106, %s107
    %p118 = scmp.eq.s32.totalorder %s14, 0
    %p119 = por %p117, %p118
    %p120 = scmp.ne.s32.totalorder %s106, %s107
    %p121 = scmp.eq.s32.totalorder %s15, 3
    %p122 = por %p120, %p121
    %p124 = scmp.ne.s32.totalorder %s107, %s123
    %p125 = scmp.eq.s32.totalorder %s15, 0
    %p126 = por %p124, %p125
    %p127 = scmp.le.s32.totalorder 1, %s9
    %p128 = scmp.lt.s32.totalorder %s9, 5
    %p129 = pnand %p127, %p128
    %p130 = pneg %p129
    // Predicated region
    $region9: #{depthwise_separable_conv.1} parent=5 // pred_check
      _
    $region10: #{depthwise_separable_conv.1} parent=5 // pred_check_branch
      %132 = sbr.rel (%p129) target = $region12
    $region11: #{depthwise_separable_conv.1} parent=5 // pred_region
      %s133 = ssub.s32 %s9, 1
      // Predicated region
      $region13: #{depthwise_separable_conv.1} parent=11 // pred_check
        %p134 = pneg %p70
      $region14: #{depthwise_separable_conv.1} parent=11 // pred_check_branch
        %136 = sbr.rel (%p134) target = $region16
      $region15: #{depthwise_separable_conv.1} parent=11 // pred_region
        _
      $region16: #{depthwise_separable_conv.1} parent=11 // pred_fallthru
        _
      // Predicated region
      $region17: #{depthwise_separable_conv.1} parent=11 // pred_check
        %p137 = pneg %p91
      $region18: #{depthwise_separable_conv.1} parent=11 // pred_check_branch
        %139 = sbr.rel (%p137) target = $region20
      $region19: #{depthwise_separable_conv.1} parent=11 // pred_region
        _
      $region20: #{depthwise_separable_conv.1} parent=11 // pred_fallthru
        _
    $region12: #{depthwise_separable_conv.1} parent=5 // pred_fallthru
      _
    %p140 = scmp.lt.s32.totalorder %s9, 4
    // Predicated region
    $region21: #{depthwise_separable_conv.1} parent=5 // pred_check
      %p141 = pneg %p140
    $region22: #{depthwise_separable_conv.1} parent=5 // pred_check_branch
      %143 = sbr.rel (%p141) target = $region24
    $region23: #{depthwise_separable_conv.1} parent=5 // pred_region
      // Predicated region
      $region25: #{depthwise_separable_conv.1} parent=23 // pred_check
        %p144 = pneg %p43
      $region26: #{depthwise_separable_conv.1} parent=23 // pred_check_branch
        %146 = sbr.rel (%p144) target = $region28
      $region27: #{depthwise_separable_conv.1} parent=23 // pred_region
        %p147 = scmp.lt.s32.totalorder %s16, 1
        %s148 = scalar_select %p147, %s16, 1
        %p149 = scmp.lt.s32.totalorder %s17, 1
        %s150 = scalar_select %p149, %s17, 1
        %s151 = smul.addr %s150, 30
        %s152 = smul.addr %s148, 60
        %s153 = sadd.s32 %s151, %s152
        %s154 = smul.addr %s153, 8
        %s155 = scalar_lea.vmem %s0, %s154
      $region28: #{depthwise_separable_conv.1} parent=23 // pred_fallthru
        _
    $region24: #{depthwise_separable_conv.1} parent=5 // pred_fallthru
      _
    %p156 = scmp.le.s32.totalorder 1, %s9
    %p157 = scmp.lt.s32.totalorder %s9, 5
    %p158 = pnand %p156, %p157
    %p159 = pneg %p158
    // Predicated region
    $region29: #{depthwise_separable_conv.1} parent=5 // pred_check
      _
    $region30: #{depthwise_separable_conv.1} parent=5 // pred_check_branch
      %161 = sbr.rel (%p158) target = $region32
    $region31: #{depthwise_separable_conv.1} parent=5 // pred_region
      %s162 = ssub.s32 %s9, 1
      %p163 = scmp.lt.s32.totalorder %s18, 1
      %s164 = scalar_select %p163, %s18, 1
      %p165 = scmp.lt.s32.totalorder %s19, 1
      %s166 = scalar_select %p165, %s19, 1
      %s167 = smul.addr %s166, 30
      %s168 = smul.addr %s164, 60
      %s169 = sadd.s32 %s167, %s168
      %s170 = smul.addr %s169, 8
      %s171 = scalar_lea.vmem %s0, %s170
      %p172 = pneg %p49
      %p173 = pneg %p46
      %p174 = pneg %p70
      %p175 = pneg %p67
      %p176 = pneg %p91
      %p177 = pneg %p88
      %p178 = pneg %p119
      %p179 = pneg %p116
      %s180 = smul.u32 8, %s19
      %p181 = scmp.lt.s32.totalorder %s18, 1
      %s182 = scalar_select %p181, %s18, 1
      %p183 = scmp.lt.s32.totalorder %s180, 15
      %s184 = scalar_select %p183, %s180, 15
      %s185 = smul.addr %s184, 2
      %s186 = smul.addr %s182, 32
      %s187 = sadd.s32 %s185, %s186
      %s188 = smul.addr %s187, 8
      %s189 = scalar_lea.vmem %s3, %s188
      %p190 = scmp.lt.s32.totalorder %s18, 1
      %s191 = scalar_select %p190, %s18, 1
      %p192 = scmp.lt.s32.totalorder %s19, 1
      %s193 = scalar_select %p192, %s19, 1
      %s194 = smul.addr %s193, 30
      %s195 = smul.addr %s191, 60
      %s196 = sadd.s32 %s194, %s195
      %s197 = smul.addr %s196, 8
      %s198 = scalar_lea.vmem %s0, %s197
      %s199 = smul.u32 8, %s19
      %p200 = scmp.lt.s32.totalorder %s18, 1
      %s201 = scalar_select %p200, %s18, 1
      %p202 = scmp.lt.s32.totalorder %s199, 15
      %s203 = scalar_select %p202, %s199, 15
      %s204 = smul.addr %s203, 2
      %s205 = smul.addr %s201, 32
      %s206 = sadd.s32 %s204, %s205
      %s207 = smul.addr %s206, 8
      %s208 = scalar_lea.vmem %s3, %s207
      %s209 = smul.u32 8, %s19
      %v210 = vld [vmem:[%s1] sm:$0xff]
      %v211 = vld [vmem:[%s1 + $0x8] sm:$0x1]
      %v212 = vld [vmem:[%s198] sm:$0xff]
      %v213 = vld [vmem:[%s198 + $0x8] sm:$0xff]
      %v214 = vld [vmem:[%s198 + $0x18] sm:$0xff]
      %v215 = vld [vmem:[%s198 + $0x20] sm:$0xff]
      %v216 = vld [vmem:[%s198 + $0x30] sm:$0xff]
      %v217 = vld [vmem:[%s198 + $0x38] sm:$0xff]
      %v218 = vld [vmem:[%s198 + $0x48] sm:$0xff]
      %v219 = vld [vmem:[%s198 + $0x50] sm:$0xff]
      %v220 = vld [vmem:[%s198 + $0x60] sm:$0xff]
      %v221 = vld [vmem:[%s198 + $0x68] sm:$0xff]
      %v222 = vld [vmem:[%s198 + $0x78] sm:$0xff]
      %v223 = vld [vmem:[%s198 + $0x80] sm:$0xff]
      %v224 = vld [vmem:[%s198 + $0x90] sm:$0xff]
      %v225 = vld [vmem:[%s198 + $0x98] sm:$0xff]
      %v226 = vld [vmem:[%s198 + $0xa8] sm:$0xff]
      %v227 = vld [vmem:[%s198 + $0xb0] sm:$0xff]
      %v228 = vlaneseq
      %v229 = vshrl.u32 %v228, 7
      %v230 = vsub.s32 0, %v229
      %v231 = vrot.slane %v210, %v230
      %v232 = vmul.f32 %v212, %v231
      %v233 = vmul.f32 %v213, %v231
      %v234 = vmul.f32 %v214, %v231
      %v235 = vmul.f32 %v215, %v231
      %v236 = vmul.f32 %v216, %v231
      %v237 = vmul.f32 %v217, %v231
      %v238 = vmul.f32 %v218, %v231
      %v239 = vmul.f32 %v219, %v231
      %v240 = vmul.f32 %v220, %v231
      %v241 = vmul.f32 %v221, %v231
      %v242 = vmul.f32 %v222, %v231
      %v243 = vmul.f32 %v223, %v231
      %v244 = vmul.f32 %v224, %v231
      %v245 = vmul.f32 %v225, %v231
      %v246 = vmul.f32 %v226, %v231
      %v247 = vmul.f32 %v227, %v231
      %v248 = vadd.f32 %v232, 0.0
      %v249 = vadd.f32 %v233, 0.0
      %v250 = vadd.f32 %v234, 0.0
      %v251 = vadd.f32 %v235, 0.0
      %v252 = vadd.f32 %v236, 0.0
      %v253 = vadd.f32 %v237, 0.0
      %v254 = vadd.f32 %v238, 0.0
      %v255 = vadd.f32 %v239, 0.0
      %v256 = vadd.f32 %v240, 0.0
      %v257 = vadd.f32 %v241, 0.0
      %v258 = vadd.f32 %v242, 0.0
      %v259 = vadd.f32 %v243, 0.0
      %v260 = vadd.f32 %v244, 0.0
      %v261 = vadd.f32 %v245, 0.0
      %v262 = vadd.f32 %v246, 0.0
      %v263 = vadd.f32 %v247, 0.0
      %v264 = vld [vmem:[%s198 + $0x1] sm:$0xff]
      %v265 = vld [vmem:[%s198 + $0x9] sm:$0xff]
      %v266 = vld [vmem:[%s198 + $0x19] sm:$0xff]
      %v267 = vld [vmem:[%s198 + $0x21] sm:$0xff]
      %v268 = vld [vmem:[%s198 + $0x31] sm:$0xff]
      %v269 = vld [vmem:[%s198 + $0x39] sm:$0xff]
      %v270 = vld [vmem:[%s198 + $0x49] sm:$0xff]
      %v271 = vld [vmem:[%s198 + $0x51] sm:$0xff]
      %v272 = vld [vmem:[%s198 + $0x61] sm:$0xff]
      %v273 = vld [vmem:[%s198 + $0x69] sm:$0xff]
      %v274 = vld [vmem:[%s198 + $0x79] sm:$0xff]
      %v275 = vld [vmem:[%s198 + $0x81] sm:$0xff]
      %v276 = vld [vmem:[%s198 + $0x91] sm:$0xff]
      %v277 = vld [vmem:[%s198 + $0x99] sm:$0xff]
      %v278 = vld [vmem:[%s198 + $0xa9] sm:$0xff]
      %v279 = vld [vmem:[%s198 + $0xb1] sm:$0xff]
      %v280 = vlaneseq
      %v281 = vshrl.u32 %v280, 7
      %v282 = vsub.s32 1, %v281
      %v283 = vrot.slane %v210, %v282
      %v284 = vmul.f32 %v264, %v283
      %v285 = vmul.f32 %v265, %v283
      %v286 = vmul.f32 %v266, %v283
      %v287 = vmul.f32 %v267, %v283
      %v288 = vmul.f32 %v268, %v283
      %v289 = vmul.f32 %v269, %v283
      %v290 = vmul.f32 %v270, %v283
      %v291 = vmul.f32 %v271, %v283
      %v292 = vmul.f32 %v272, %v283
      %v293 = vmul.f32 %v273, %v283
      %v294 = vmul.f32 %v274, %v283
      %v295 = vmul.f32 %v275, %v283
      %v296 = vmul.f32 %v276, %v283
      %v297 = vmul.f32 %v277, %v283
      %v298 = vmul.f32 %v278, %v283
      %v299 = vmul.f32 %v279, %v283
      %v300 = vadd.f32 %v248, %v284
      %v301 = vadd.f32 %v249, %v285
      %v302 = vadd.f32 %v250, %v286
      %v303 = vadd.f32 %v251, %v287
      %v304 = vadd.f32 %v252, %v288
      %v305 = vadd.f32 %v253, %v289
      %v306 = vadd.f32 %v254, %v290
      %v307 = vadd.f32 %v255, %v291
      %v308 = vadd.f32 %v256, %v292
      %v309 = vadd.f32 %v257, %v293
      %v310 = vadd.f32 %v258, %v294
      %v311 = vadd.f32 %v259, %v295
      %v312 = vadd.f32 %v260, %v296
      %v313 = vadd.f32 %v261, %v297
      %v314 = vadd.f32 %v262, %v298
      %v315 = vadd.f32 %v263, %v299
      %v316 = vld [vmem:[%s198 + $0x2] sm:$0xff]
      %v317 = vld [vmem:[%s198 + $0xa] sm:$0xff]
      %v318 = vld [vmem:[%s198 + $0x1a] sm:$0xff]
      %v319 = vld [vmem:[%s198 + $0x22] sm:$0xff]
      %v320 = vld [vmem:[%s198 + $0x32] sm:$0xff]
      %v321 = vld [vmem:[%s198 + $0x3a] sm:$0xff]
      %v322 = vld [vmem:[%s198 + $0x4a] sm:$0xff]
      %v323 = vld [vmem:[%s198 + $0x52] sm:$0xff]
      %v324 = vld [vmem:[%s198 + $0x62] sm:$0xff]
      %v325 = vld [vmem:[%s198 + $0x6a] sm:$0xff]
      %v326 = vld [vmem:[%s198 + $0x7a] sm:$0xff]
      %v327 = vld [vmem:[%s198 + $0x82] sm:$0xff]
      %v328 = vld [vmem:[%s198 + $0x92] sm:$0xff]
      %v329 = vld [vmem:[%s198 + $0x9a] sm:$0xff]
      %v330 = vld [vmem:[%s198 + $0xaa] sm:$0xff]
      %v331 = vld [vmem:[%s198 + $0xb2] sm:$0xff]
      %v332 = vlaneseq
      %v333 = vshrl.u32 %v332, 7
      %v334 = vsub.s32 2, %v333
      %v335 = vrot.slane %v210, %v334
      %v336 = vmul.f32 %v316, %v335
      %v337 = vmul.f32 %v317, %v335
      %v338 = vmul.f32 %v318, %v335
      %v339 = vmul.f32 %v319, %v335
      %v340 = vmul.f32 %v320, %v335
      %v341 = vmul.f32 %v321, %v335
      %v342 = vmul.f32 %v322, %v335
      %v343 = vmul.f32 %v323, %v335
      %v344 = vmul.f32 %v324, %v335
      %v345 = vmul.f32 %v325, %v335
      %v346 = vmul.f32 %v326, %v335
      %v347 = vmul.f32 %v327, %v335
      %v348 = vmul.f32 %v328, %v335
      %v349 = vmul.f32 %v329, %v335
      %v350 = vmul.f32 %v330, %v335
      %v351 = vmul.f32 %v331, %v335
      %v352 = vadd.f32 %v300, %v336
      %v353 = vadd.f32 %v301, %v337
      %v354 = vadd.f32 %v302, %v338
      %v355 = vadd.f32 %v303, %v339
      %v356 = vadd.f32 %v304, %v340
      %v357 = vadd.f32 %v305, %v341
      %v358 = vadd.f32 %v306, %v342
      %v359 = vadd.f32 %v307, %v343
      %v360 = vadd.f32 %v308, %v344
      %v361 = vadd.f32 %v309, %v345
      %v362 = vadd.f32 %v310, %v346
      %v363 = vadd.f32 %v311, %v347
      %v364 = vadd.f32 %v312, %v348
      %v365 = vadd.f32 %v313, %v349
      %v366 = vadd.f32 %v314, %v350
      %v367 = vadd.f32 %v315, %v351
      %s368 = scalar_lea.vmem %s198, 24
      %v369 = vld [vmem:[%s368] sm:$0xff]
      %v370 = vld [vmem:[%s368 + $0x8] sm:$0xff]
      %v371 = vld [vmem:[%s368 + $0x18] sm:$0xff]
      %v372 = vld [vmem:[%s368 + $0x20] sm:$0xff]
      %v373 = vld [vmem:[%s368 + $0x30] sm:$0xff]
      %v374 = vld [vmem:[%s368 + $0x38] sm:$0xff]
      %v375 = vld [vmem:[%s368 + $0x48] sm:$0xff]
      %v376 = vld [vmem:[%s368 + $0x50] sm:$0xff]
      %v377 = vld [vmem:[%s368 + $0x60] sm:$0xff]
      %v378 = vld [vmem:[%s368 + $0x68] sm:$0xff]
      %v379 = vld [vmem:[%s368 + $0x78] sm:$0xff]
      %v380 = vld [vmem:[%s368 + $0x80] sm:$0xff]
      %v381 = vld [vmem:[%s368 + $0x90] sm:$0xff]
      %v382 = vld [vmem:[%s368 + $0x98] sm:$0xff]
      %v383 = vld [vmem:[%s368 + $0xa8] sm:$0xff]
      %v384 = vld [vmem:[%s368 + $0xb0] sm:$0xff]
      %v385 = vlaneseq
      %v386 = vshrl.u32 %v385, 7
      %v387 = vsub.s32 3, %v386
      %v388 = vrot.slane %v210, %v387
      %v389 = vmul.f32 %v369, %v388
      %v390 = vmul.f32 %v370, %v388
      %v391 = vmul.f32 %v371, %v388
      %v392 = vmul.f32 %v372, %v388
      %v393 = vmul.f32 %v373, %v388
      %v394 = vmul.f32 %v374, %v388
      %v395 = vmul.f32 %v375, %v388
      %v396 = vmul.f32 %v376, %v388
      %v397 = vmul.f32 %v377, %v388
      %v398 = vmul.f32 %v378, %v388
      %v399 = vmul.f32 %v379, %v388
      %v400 = vmul.f32 %v380, %v388
      %v401 = vmul.f32 %v381, %v388
      %v402 = vmul.f32 %v382, %v388
      %v403 = vmul.f32 %v383, %v388
      %v404 = vmul.f32 %v384, %v388
      %v405 = vadd.f32 %v352, %v389
      %v406 = vadd.f32 %v353, %v390
      %v407 = vadd.f32 %v354, %v391
      %v408 = vadd.f32 %v355, %v392
      %v409 = vadd.f32 %v356, %v393
      %v410 = vadd.f32 %v357, %v394
      %v411 = vadd.f32 %v358, %v395
      %v412 = vadd.f32 %v359, %v396
      %v413 = vadd.f32 %v360, %v397
      %v414 = vadd.f32 %v361, %v398
      %v415 = vadd.f32 %v362, %v399
      %v416 = vadd.f32 %v363, %v400
      %v417 = vadd.f32 %v364, %v401
      %v418 = vadd.f32 %v365, %v402
      %v419 = vadd.f32 %v366, %v403
      %v420 = vadd.f32 %v367, %v404
      %v421 = vld [vmem:[%s368 + $0x1] sm:$0xff]
      %v422 = vld [vmem:[%s368 + $0x9] sm:$0xff]
      %v423 = vld [vmem:[%s368 + $0x19] sm:$0xff]
      %v424 = vld [vmem:[%s368 + $0x21] sm:$0xff]
      %v425 = vld [vmem:[%s368 + $0x31] sm:$0xff]
      %v426 = vld [vmem:[%s368 + $0x39] sm:$0xff]
      %v427 = vld [vmem:[%s368 + $0x49] sm:$0xff]
      %v428 = vld [vmem:[%s368 + $0x51] sm:$0xff]
      %v429 = vld [vmem:[%s368 + $0x61] sm:$0xff]
      %v430 = vld [vmem:[%s368 + $0x69] sm:$0xff]
      %v431 = vld [vmem:[%s368 + $0x79] sm:$0xff]
      %v432 = vld [vmem:[%s368 + $0x81] sm:$0xff]
      %v433 = vld [vmem:[%s368 + $0x91] sm:$0xff]
      %v434 = vld [vmem:[%s368 + $0x99] sm:$0xff]
      %v435 = vld [vmem:[%s368 + $0xa9] sm:$0xff]
      %v436 = vld [vmem:[%s368 + $0xb1] sm:$0xff]
      %v437 = vlaneseq
      %v438 = vshrl.u32 %v437, 7
      %v439 = vsub.s32 4, %v438
      %v440 = vrot.slane %v210, %v439
      %v441 = vmul.f32 %v421, %v440
      %v442 = vmul.f32 %v422, %v440
      %v443 = vmul.f32 %v423, %v440
      %v444 = vmul.f32 %v424, %v440
      %v445 = vmul.f32 %v425, %v440
      %v446 = vmul.f32 %v426, %v440
      %v447 = vmul.f32 %v427, %v440
      %v448 = vmul.f32 %v428, %v440
      %v449 = vmul.f32 %v429, %v440
      %v450 = vmul.f32 %v430, %v440
      %v451 = vmul.f32 %v431, %v440
      %v452 = vmul.f32 %v432, %v440
      %v453 = vmul.f32 %v433, %v440
      %v454 = vmul.f32 %v434, %v440
      %v455 = vmul.f32 %v435, %v440
      %v456 = vmul.f32 %v436, %v440
      %v457 = vadd.f32 %v405, %v441
      %v458 = vadd.f32 %v406, %v442
      %v459 = vadd.f32 %v407, %v443
      %v460 = vadd.f32 %v408, %v444
      %v461 = vadd.f32 %v409, %v445
      %v462 = vadd.f32 %v410, %v446
      %v463 = vadd.f32 %v411, %v447
      %v464 = vadd.f32 %v412, %v448
      %v465 = vadd.f32 %v413, %v449
      %v466 = vadd.f32 %v414, %v450
      %v467 = vadd.f32 %v415, %v451
      %v468 = vadd.f32 %v416, %v452
      %v469 = vadd.f32 %v417, %v453
      %v470 = vadd.f32 %v418, %v454
      %v471 = vadd.f32 %v419, %v455
      %v472 = vadd.f32 %v420, %v456
      %v473 = vld [vmem:[%s368 + $0x2] sm:$0xff]
      %v474 = vld [vmem:[%s368 + $0xa] sm:$0xff]
      %v475 = vld [vmem:[%s368 + $0x1a] sm:$0xff]
      %v476 = vld [vmem:[%s368 + $0x22] sm:$0xff]
      %v477 = vld [vmem:[%s368 + $0x32] sm:$0xff]
      %v478 = vld [vmem:[%s368 + $0x3a] sm:$0xff]
      %v479 = vld [vmem:[%s368 + $0x4a] sm:$0xff]
      %v480 = vld [vmem:[%s368 + $0x52] sm:$0xff]
      %v481 = vld [vmem:[%s368 + $0x62] sm:$0xff]
      %v482 = vld [vmem:[%s368 + $0x6a] sm:$0xff]
      %v483 = vld [vmem:[%s368 + $0x7a] sm:$0xff]
      %v484 = vld [vmem:[%s368 + $0x82] sm:$0xff]
      %v485 = vld [vmem:[%s368 + $0x92] sm:$0xff]
      %v486 = vld [vmem:[%s368 + $0x9a] sm:$0xff]
      %v487 = vld [vmem:[%s368 + $0xaa] sm:$0xff]
      %v488 = vld [vmem:[%s368 + $0xb2] sm:$0xff]
      %v489 = vlaneseq
      %v490 = vshrl.u32 %v489, 7
      %v491 = vsub.s32 5, %v490
      %v492 = vrot.slane %v210, %v491
      %v493 = vmul.f32 %v473, %v492
      %v494 = vmul.f32 %v474, %v492
      %v495 = vmul.f32 %v475, %v492
      %v496 = vmul.f32 %v476, %v492
      %v497 = vmul.f32 %v477, %v492
      %v498 = vmul.f32 %v478, %v492
      %v499 = vmul.f32 %v479, %v492
      %v500 = vmul.f32 %v480, %v492
      %v501 = vmul.f32 %v481, %v492
      %v502 = vmul.f32 %v482, %v492
      %v503 = vmul.f32 %v483, %v492
      %v504 = vmul.f32 %v484, %v492
      %v505 = vmul.f32 %v485, %v492
      %v506 = vmul.f32 %v486, %v492
      %v507 = vmul.f32 %v487, %v492
      %v508 = vmul.f32 %v488, %v492
      %v509 = vadd.f32 %v457, %v493
      %v510 = vadd.f32 %v458, %v494
      %v511 = vadd.f32 %v459, %v495
      %v512 = vadd.f32 %v460, %v496
      %v513 = vadd.f32 %v461, %v497
      %v514 = vadd.f32 %v462, %v498
      %v515 = vadd.f32 %v463, %v499
      %v516 = vadd.f32 %v464, %v500
      %v517 = vadd.f32 %v465, %v501
      %v518 = vadd.f32 %v466, %v502
      %v519 = vadd.f32 %v467, %v503
      %v520 = vadd.f32 %v468, %v504
      %v521 = vadd.f32 %v469, %v505
      %v522 = vadd.f32 %v470, %v506
      %v523 = vadd.f32 %v471, %v507
      %v524 = vadd.f32 %v472, %v508
      %s525 = scalar_lea.vmem %s198, 48
      %v526 = vld [vmem:[%s525] sm:$0xff]
      %v527 = vld [vmem:[%s525 + $0x8] sm:$0xff]
      %v528 = vld [vmem:[%s525 + $0x18] sm:$0xff]
      %v529 = vld [vmem:[%s525 + $0x20] sm:$0xff]
      %v530 = vld [vmem:[%s525 + $0x30] sm:$0xff]
      %v531 = vld [vmem:[%s525 + $0x38] sm:$0xff]
      %v532 = vld [vmem:[%s525 + $0x48] sm:$0xff]
      %v533 = vld [vmem:[%s525 + $0x50] sm:$0xff]
      %v534 = vld [vmem:[%s525 + $0x60] sm:$0xff]
      %v535 = vld [vmem:[%s525 + $0x68] sm:$0xff]
      %v536 = vld [vmem:[%s525 + $0x78] sm:$0xff]
      %v537 = vld [vmem:[%s525 + $0x80] sm:$0xff]
      %v538 = vld [vmem:[%s525 + $0x90] sm:$0xff]
      %v539 = vld [vmem:[%s525 + $0x98] sm:$0xff]
      %v540 = vld [vmem:[%s525 + $0xa8] sm:$0xff]
      %v541 = vld [vmem:[%s525 + $0xb0] sm:$0xff]
      %v542 = vlaneseq
      %v543 = vshrl.u32 %v542, 7
      %v544 = vsub.s32 6, %v543
      %v545 = vrot.slane %v210, %v544
      %v546 = vmul.f32 %v526, %v545
      %v547 = vmul.f32 %v527, %v545
      %v548 = vmul.f32 %v528, %v545
      %v549 = vmul.f32 %v529, %v545
      %v550 = vmul.f32 %v530, %v545
      %v551 = vmul.f32 %v531, %v545
      %v552 = vmul.f32 %v532, %v545
      %v553 = vmul.f32 %v533, %v545
      %v554 = vmul.f32 %v534, %v545
      %v555 = vmul.f32 %v535, %v545
      %v556 = vmul.f32 %v536, %v545
      %v557 = vmul.f32 %v537, %v545
      %v558 = vmul.f32 %v538, %v545
      %v559 = vmul.f32 %v539, %v545
      %v560 = vmul.f32 %v540, %v545
      %v561 = vmul.f32 %v541, %v545
      %v562 = vadd.f32 %v509, %v546
      %v563 = vadd.f32 %v510, %v547
      %v564 = vadd.f32 %v511, %v548
      %v565 = vadd.f32 %v512, %v549
      %v566 = vadd.f32 %v513, %v550
      %v567 = vadd.f32 %v514, %v551
      %v568 = vadd.f32 %v515, %v552
      %v569 = vadd.f32 %v516, %v553
      %v570 = vadd.f32 %v517, %v554
      %v571 = vadd.f32 %v518, %v555
      %v572 = vadd.f32 %v519, %v556
      %v573 = vadd.f32 %v520, %v557
      %v574 = vadd.f32 %v521, %v558
      %v575 = vadd.f32 %v522, %v559
      %v576 = vadd.f32 %v523, %v560
      %v577 = vadd.f32 %v524, %v561
      %v578 = vld [vmem:[%s525 + $0x1] sm:$0xff]
      %v579 = vld [vmem:[%s525 + $0x9] sm:$0xff]
      %v580 = vld [vmem:[%s525 + $0x19] sm:$0xff]
      %v581 = vld [vmem:[%s525 + $0x21] sm:$0xff]
      %v582 = vld [vmem:[%s525 + $0x31] sm:$0xff]
      %v583 = vld [vmem:[%s525 + $0x39] sm:$0xff]
      %v584 = vld [vmem:[%s525 + $0x49] sm:$0xff]
      %v585 = vld [vmem:[%s525 + $0x51] sm:$0xff]
      %v586 = vld [vmem:[%s525 + $0x61] sm:$0xff]
      %v587 = vld [vmem:[%s525 + $0x69] sm:$0xff]
      %v588 = vld [vmem:[%s525 + $0x79] sm:$0xff]
      %v589 = vld [vmem:[%s525 + $0x81] sm:$0xff]
      %v590 = vld [vmem:[%s525 + $0x91] sm:$0xff]
      %v591 = vld [vmem:[%s525 + $0x99] sm:$0xff]
      %v592 = vld [vmem:[%s525 + $0xa9] sm:$0xff]
      %v593 = vld [vmem:[%s525 + $0xb1] sm:$0xff]
      %v594 = vlaneseq
      %v595 = vshrl.u32 %v594, 7
      %v596 = vsub.s32 7, %v595
      %v597 = vrot.slane %v210, %v596
      %v598 = vmul.f32 %v578, %v597
      %v599 = vmul.f32 %v579, %v597
      %v600 = vmul.f32 %v580, %v597
      %v601 = vmul.f32 %v581, %v597
      %v602 = vmul.f32 %v582, %v597
      %v603 = vmul.f32 %v583, %v597
      %v604 = vmul.f32 %v584, %v597
      %v605 = vmul.f32 %v585, %v597
      %v606 = vmul.f32 %v586, %v597
      %v607 = vmul.f32 %v587, %v597
      %v608 = vmul.f32 %v588, %v597
      %v609 = vmul.f32 %v589, %v597
      %v610 = vmul.f32 %v590, %v597
      %v611 = vmul.f32 %v591, %v597
      %v612 = vmul.f32 %v592, %v597
      %v613 = vmul.f32 %v593, %v597
      %v614 = vadd.f32 %v562, %v598
      %v615 = vadd.f32 %v563, %v599
      %v616 = vadd.f32 %v564, %v600
      %v617 = vadd.f32 %v565, %v601
      %v618 = vadd.f32 %v566, %v602
      %v619 = vadd.f32 %v567, %v603
      %v620 = vadd.f32 %v568, %v604
      %v621 = vadd.f32 %v569, %v605
      %v622 = vadd.f32 %v570, %v606
      %v623 = vadd.f32 %v571, %v607
      %v624 = vadd.f32 %v572, %v608
      %v625 = vadd.f32 %v573, %v609
      %v626 = vadd.f32 %v574, %v610
      %v627 = vadd.f32 %v575, %v611
      %v628 = vadd.f32 %v576, %v612
      %v629 = vadd.f32 %v577, %v613
      %v630 = vld [vmem:[%s525 + $0x2] sm:$0xff]
      %v631 = vld [vmem:[%s525 + $0xa] sm:$0xff]
      %v632 = vld [vmem:[%s525 + $0x1a] sm:$0xff]
      %v633 = vld [vmem:[%s525 + $0x22] sm:$0xff]
      %v634 = vld [vmem:[%s525 + $0x32] sm:$0xff]
      %v635 = vld [vmem:[%s525 + $0x3a] sm:$0xff]
      %v636 = vld [vmem:[%s525 + $0x4a] sm:$0xff]
      %v637 = vld [vmem:[%s525 + $0x52] sm:$0xff]
      %v638 = vld [vmem:[%s525 + $0x62] sm:$0xff]
      %v639 = vld [vmem:[%s525 + $0x6a] sm:$0xff]
      %v640 = vld [vmem:[%s525 + $0x7a] sm:$0xff]
      %v641 = vld [vmem:[%s525 + $0x82] sm:$0xff]
      %v642 = vld [vmem:[%s525 + $0x92] sm:$0xff]
      %v643 = vld [vmem:[%s525 + $0x9a] sm:$0xff]
      %v644 = vld [vmem:[%s525 + $0xaa] sm:$0xff]
      %v645 = vld [vmem:[%s525 + $0xb2] sm:$0xff]
      %v646 = vlaneseq
      %v647 = vshrl.u32 %v646, 7
      %v648 = vsub.s32 0, %v647
      %v649 = vrot.slane %v211, %v648
      %v650 = vmul.f32 %v630, %v649
      %v651 = vmul.f32 %v631, %v649
      %v652 = vmul.f32 %v632, %v649
      %v653 = vmul.f32 %v633, %v649
      %v654 = vmul.f32 %v634, %v649
      %v655 = vmul.f32 %v635, %v649
      %v656 = vmul.f32 %v636, %v649
      %v657 = vmul.f32 %v637, %v649
      %v658 = vmul.f32 %v638, %v649
      %v659 = vmul.f32 %v639, %v649
      %v660 = vmul.f32 %v640, %v649
      %v661 = vmul.f32 %v641, %v649
      %v662 = vmul.f32 %v642, %v649
      %v663 = vmul.f32 %v643, %v649
      %v664 = vmul.f32 %v644, %v649
      %v665 = vmul.f32 %v645, %v649
      %v666 = vadd.f32 %v614, %v650
      %v667 = vadd.f32 %v615, %v651
      %v668 = vadd.f32 %v616, %v652
      %v669 = vadd.f32 %v617, %v653
      %v670 = vadd.f32 %v618, %v654
      %v671 = vadd.f32 %v619, %v655
      %v672 = vadd.f32 %v620, %v656
      %v673 = vadd.f32 %v621, %v657
      %v674 = vadd.f32 %v622, %v658
      %v675 = vadd.f32 %v623, %v659
      %v676 = vadd.f32 %v624, %v660
      %v677 = vadd.f32 %v625, %v661
      %v678 = vadd.f32 %v626, %v662
      %v679 = vadd.f32 %v627, %v663
      %v680 = vadd.f32 %v628, %v664
      %v681 = vadd.f32 %v629, %v665
      %v682 = vld [vmem:[%s2] sm:$0xf]
      %vm683 = vcmask 31744
      %v685 = vsel %vm683, %v666, 0
      %v688 = vsel %vm683, %v667, 0
      %v691 = vsel %vm683, %v668, 0
      %v694 = vsel %vm683, %v669, 0
      %v697 = vsel %vm683, %v670, 0
      %v700 = vsel %vm683, %v671, 0
      %v703 = vsel %vm683, %v672, 0
      %v706 = vsel %vm683, %v673, 0
      %v709 = vsel %vm683, %v674, 0
      %v712 = vsel %vm683, %v675, 0
      %v715 = vsel %vm683, %v676, 0
      %v718 = vsel %vm683, %v677, 0
      %v721 = vsel %vm683, %v678, 0
      %v724 = vsel %vm683, %v679, 0
      %v727 = vsel %vm683, %v680, 0
      %v730 = vsel %vm683, %v681, 0
      %vm732 = vcmask 1043456
      %v734 = vsel %vm732, %v682, 0
      %736 = vmatprep.subr.mxu0 0.0
      %737 = vmatpush1.msra.mxu0 %v734
      %738 = vmatprep.subr.mxu0 0.0
      %739 = vmatpush1.msra.mxu0 0.0
      %740 = vmatprep.subr.mxu0 0.0
      %741 = vmatpush1.msra.mxu0 0.0
      %742 = vmatprep.subr.mxu0 0.0
      %743 = vmatpush1.msra.mxu0 0.0
      %744 = vmatprep.subr.mxu0 0.0
      %745 = vmatpush1.msra.mxu0 0.0
      %746 = vmatprep.subr.mxu0 0.0
      %747 = vmatpush1.msra.mxu0 0.0
      %748 = vmatprep.subr.mxu0 0.0
      %749 = vmatpush1.msra.mxu0 0.0
      %750 = vmatprep.subr.mxu0 0.0
      %751 = vmatpush1.msra.mxu0 0.0
      %752 = vmatprep.subr.mxu0 0.0
      %753 = vmatpush1.msra.mxu0 0.0
      %754 = vmatprep.subr.mxu0 0.0
      %755 = vmatpush1.msra.mxu0 0.0
      %756 = vmatprep.subr.mxu0 0.0
      %757 = vmatpush1.msra.mxu0 0.0
      %758 = vmatprep.subr.mxu0 0.0
      %759 = vmatpush1.msra.mxu0 0.0
      %760 = vmatprep.subr.mxu0 0.0
      %761 = vmatpush1.msra.mxu0 0.0
      %762 = vmatprep.subr.mxu0 0.0
      %763 = vmatpush1.msra.mxu0 0.0
      %764 = vmatprep.subr.mxu0 0.0
      %765 = vmatpush1.msra.mxu0 0.0
      %766 = vmatprep.subr.mxu0 0.0
      %767 = vmatpush1.msra.mxu0 0.0
      %768 = vmatprep.subr.mxu0 0.0
      %769 = vmatpush1.msra.mxu0 0.0
      %770 = vmatprep.subr.mxu0 0.0
      %771 = vmatpush1.msra.mxu0 0.0
      %772 = vmatprep.subr.mxu0 0.0
      %773 = vmatpush1.msra.mxu0 0.0
      %774 = vmatprep.subr.mxu0 0.0
      %775 = vmatpush1.msra.mxu0 0.0
      %776 = vmatprep.subr.mxu0 0.0
      %777 = vmatpush1.msra.mxu0 0.0
      %778 = vmatprep.subr.mxu0 0.0
      %779 = vmatpush1.msra.mxu0 0.0
      %780 = vmatprep.subr.mxu0 0.0
      %781 = vmatpush1.msra.mxu0 0.0
      %782 = vmatprep.subr.mxu0 0.0
      %783 = vmatpush1.msra.mxu0 0.0
      %784 = vmatprep.subr.mxu0 0.0
      %785 = vmatpush1.msra.mxu0 0.0
      %786 = vmatprep.subr.mxu0 0.0
      %787 = vmatpush1.msra.mxu0 0.0
      %788 = vmatprep.subr.mxu0 0.0
      %789 = vmatpush1.msra.mxu0 0.0
      %790 = vmatprep.subr.mxu0 0.0
      %791 = vmatpush1.msra.mxu0 0.0
      %792 = vmatprep.subr.mxu0 0.0
      %793 = vmatpush1.msra.mxu0 0.0
      %794 = vmatprep.subr.mxu0 0.0
      %795 = vmatpush1.msra.mxu0 0.0
      %796 = vmatprep.subr.mxu0 0.0
      %797 = vmatpush1.msra.mxu0 0.0
      %798 = vmatprep.subr.mxu0 0.0
      %799 = vmatpush1.msra.mxu0 0.0
      %800 = vmatprep.mubr.f32.mxu0 0.0
      %801 = vmatmul.mubr.f32.gmra.mrb[0].mxu0 %v685
      %v802 = vpop.f32.mrb[0].mxu0
      %v803 = vadd.f32 0.0, %v802
      %v804 = vpop.f32.mrb[0].mxu0
      %805 = vmatprep.mubr.f32.mxu0 0.0
      %806 = vmatmul.mubr.f32.gmra.mrb[0].mxu0 %v688
      %v807 = vpop.f32.mrb[0].mxu0
      %v808 = vadd.f32 0.0, %v807
      %v809 = vpop.f32.mrb[0].mxu0
      %810 = vmatprep.mubr.f32.mxu0 0.0
      %811 = vmatmul.mubr.f32.gmra.mrb[0].mxu0 %v691
      %v812 = vpop.f32.mrb[0].mxu0
      %v813 = vadd.f32 0.0, %v812
      %v814 = vpop.f32.mrb[0].mxu0
      %815 = vmatprep.mubr.f32.mxu0 0.0
      %816 = vmatmul.mubr.f32.gmra.mrb[0].mxu0 %v694
      %v817 = vpop.f32.mrb[0].mxu0
      %v818 = vadd.f32 0.0, %v817
      %v819 = vpop.f32.mrb[0].mxu0
      %820 = vmatprep.mubr.f32.mxu0 0.0
      %821 = vmatmul.mubr.f32.gmra.mrb[0].mxu0 %v697
      %v822 = vpop.f32.mrb[0].mxu0
      %v823 = vadd.f32 0.0, %v822
      %v824 = vpop.f32.mrb[0].mxu0
      %825 = vmatprep.mubr.f32.mxu0 0.0
      %826 = vmatmul.mubr.f32.gmra.mrb[0].mxu0 %v700
      %v827 = vpop.f32.mrb[0].mxu0
      %v828 = vadd.f32 0.0, %v827
      %v829 = vpop.f32.mrb[0].mxu0
      %830 = vmatprep.mubr.f32.mxu0 0.0
      %831 = vmatmul.mubr.f32.gmra.mrb[0].mxu0 %v703
      %v832 = vpop.f32.mrb[0].mxu0
      %v833 = vadd.f32 0.0, %v832
      %v834 = vpop.f32.mrb[0].mxu0
      %835 = vmatprep.mubr.f32.mxu0 0.0
      %836 = vmatmul.mubr.f32.gmra.mrb[0].mxu0 %v706
      %v837 = vpop.f32.mrb[0].mxu0
      %v838 = vadd.f32 0.0, %v837
      %v839 = vpop.f32.mrb[0].mxu0
      %840 = vmatprep.mubr.f32.mxu0 0.0
      %841 = vmatmul.mubr.f32.gmra.mrb[0].mxu0 %v709
      %v842 = vpop.f32.mrb[0].mxu0
      %v843 = vadd.f32 0.0, %v842
      %v844 = vpop.f32.mrb[0].mxu0
      %845 = vmatprep.mubr.f32.mxu0 0.0
      %846 = vmatmul.mubr.f32.gmra.mrb[0].mxu0 %v712
      %v847 = vpop.f32.mrb[0].mxu0
      %v848 = vadd.f32 0.0, %v847
      %v849 = vpop.f32.mrb[0].mxu0
      %850 = vmatprep.mubr.f32.mxu0 0.0
      %851 = vmatmul.mubr.f32.gmra.mrb[0].mxu0 %v715
      %v852 = vpop.f32.mrb[0].mxu0
      %v853 = vadd.f32 0.0, %v852
      %v854 = vpop.f32.mrb[0].mxu0
      %855 = vmatprep.mubr.f32.mxu0 0.0
      %856 = vmatmul.mubr.f32.gmra.mrb[0].mxu0 %v718
      %v857 = vpop.f32.mrb[0].mxu0
      %v858 = vadd.f32 0.0, %v857
      %v859 = vpop.f32.mrb[0].mxu0
      %860 = vmatprep.mubr.f32.mxu0 0.0
      %861 = vmatmul.mubr.f32.gmra.mrb[0].mxu0 %v721
      %v862 = vpop.f32.mrb[0].mxu0
      %v863 = vadd.f32 0.0, %v862
      %v864 = vpop.f32.mrb[0].mxu0
      %865 = vmatprep.mubr.f32.mxu0 0.0
      %866 = vmatmul.mubr.f32.gmra.mrb[0].mxu0 %v724
      %v867 = vpop.f32.mrb[0].mxu0
      %v868 = vadd.f32 0.0, %v867
      %v869 = vpop.f32.mrb[0].mxu0
      %870 = vmatprep.mubr.f32.mxu0 0.0
      %871 = vmatmul.mubr.f32.gmra.mrb[0].mxu0 %v727
      %v872 = vpop.f32.mrb[0].mxu0
      %v873 = vadd.f32 0.0, %v872
      %v874 = vpop.f32.mrb[0].mxu0
      %875 = vmatprep.mubr.f32.mxu0 0.0
      %876 = vmatmul.mubr.f32.gmra.mrb[0].mxu0 %v730
      %v877 = vpop.f32.mrb[0].mxu0
      %v878 = vadd.f32 0.0, %v877
      %v879 = vpop.f32.mrb[0].mxu0
      %880 = vdwg.mxu0
      %vm881 = vcmask 64512
      %882 = vst.msk [vmem:[%s208] sm:$0xff] %vm881, %v803
      %883 = vst.msk [vmem:[%s208 + $0x8] sm:$0xff] %vm881, %v808
      %884 = vst.msk [vmem:[%s208 + $0x10] sm:$0xff] %vm881, %v813
      %885 = vst.msk [vmem:[%s208 + $0x18] sm:$0xff] %vm881, %v818
      %886 = vst.msk [vmem:[%s208 + $0x20] sm:$0xff] %vm881, %v823
      %887 = vst.msk [vmem:[%s208 + $0x28] sm:$0xff] %vm881, %v828
      %888 = vst.msk [vmem:[%s208 + $0x30] sm:$0xff] %vm881, %v833
      %889 = vst.msk [vmem:[%s208 + $0x38] sm:$0xff] %vm881, %v838
      %890 = vst.msk [vmem:[%s208 + $0x40] sm:$0xff] %vm881, %v843
      %891 = vst.msk [vmem:[%s208 + $0x48] sm:$0xff] %vm881, %v848
      %892 = vst.msk [vmem:[%s208 + $0x50] sm:$0xff] %vm881, %v853
      %893 = vst.msk [vmem:[%s208 + $0x58] sm:$0xff] %vm881, %v858
      %894 = vst.msk [vmem:[%s208 + $0x60] sm:$0xff] %vm881, %v863
      %895 = vst.msk [vmem:[%s208 + $0x68] sm:$0xff] %vm881, %v868
      %896 = vst.msk [vmem:[%s208 + $0x70] sm:$0xff] %vm881, %v873
      %897 = vst.msk [vmem:[%s208 + $0x78] sm:$0xff] %vm881, %v878
      %s898 = smul.u32 8, %s19
      %p899 = scmp.lt.s32.totalorder %s18, 1
      %s900 = scalar_select %p899, %s18, 1
      %p901 = scmp.lt.s32.totalorder %s898, 15
      %s902 = scalar_select %p901, %s898, 15
      %s903 = smul.addr %s902, 2
      %s904 = smul.addr %s900, 32
      %s905 = sadd.s32 %s903, %s904
      %s906 = smul.addr %s905, 8
      %s907 = scalar_lea.vmem %s3, %s906
      // Predicated region
      $region33: #{depthwise_separable_conv.1} parent=31 // pred_check
        %p908 = pneg %p116
      $region34: #{depthwise_separable_conv.1} parent=31 // pred_check_branch
        %910 = sbr.rel (%p908) target = $region36
      $region35: #{depthwise_separable_conv.1} parent=31 // pred_region
        %s911 = smul.u32 8, %s19
      $region36: #{depthwise_separable_conv.1} parent=31 // pred_fallthru
        _
    $region32: #{depthwise_separable_conv.1} parent=5 // pred_fallthru
      _
    %p912 = scmp.le.s32.totalorder 2, %s9
    // Predicated region
    $region37: #{depthwise_separable_conv.1} parent=5 // pred_check
      %p913 = pneg %p912
    $region38: #{depthwise_separable_conv.1} parent=5 // pred_check_branch
      %915 = sbr.rel (%p913) target = $region40
    $region39: #{depthwise_separable_conv.1} parent=5 // pred_region
      %s916 = ssub.s32 %s9, 2
      // Predicated region
      $region41: #{depthwise_separable_conv.1} parent=39 // pred_check
        %p917 = pneg %p122
      $region42: #{depthwise_separable_conv.1} parent=39 // pred_check_branch
        %919 = sbr.rel (%p917) target = $region44
      $region43: #{depthwise_separable_conv.1} parent=39 // pred_region
        %s920 = smul.u32 8, %s21
        %p921 = scmp.lt.s32.totalorder %s20, 1
        %s922 = scalar_select %p921, %s20, 1
        %p923 = scmp.lt.s32.totalorder %s920, 15
        %s924 = scalar_select %p923, %s920, 15
        %s925 = smul.addr %s924, 2
        %s926 = smul.addr %s922, 32
        %s927 = sadd.s32 %s925, %s926
        %s928 = smul.addr %s927, 8
        %s929 = scalar_lea.vmem %s3, %s928
      $region44: #{depthwise_separable_conv.1} parent=39 // pred_fallthru
        _
    $region40: #{depthwise_separable_conv.1} parent=5 // pred_fallthru
      _
  $region6: #{depthwise_separable_conv.1} parent=0 // loop_footer
    %s13 = sadd.s32 1, %s9
  $region7: #{depthwise_separable_conv.1} parent=0 // loop_footer_branch
    %8 = sbr.rel target = $region3
  $region8: #{depthwise_separable_conv.1} parent=0 // loop_exit
    _

</llo_original>
